<compile_context>
chip_gen: v6e
topology: v6e:2x2x1
jax: 0.10.0
libtpu: 0.0.40
codegen_flags: <defaults>
</compile_context>

<pallas_src>
import functools

import jax
import jax.numpy as jnp
from jax.experimental import pallas as pl
from jax.experimental.pallas import tpu as pltpu

# Make the pure-JAX reference use full-f32 matmuls so the f32 kernel path can be checked
# with a tight tolerance.
jax.config.update("jax_default_matmul_precision", "highest")


# ---------------------------------------------------------------------------
# Generic tiled matmul with epilogue:  out = row_scale * (A @ B) + col_bias
# ---------------------------------------------------------------------------
def _mm_epilogue_kernel(a_ref, b_ref, scale_ref, bias_ref, o_ref, acc_ref):
    kk = pl.program_id(2)

    @pl.when(kk == 0)
    def _init():
        acc_ref[...] = jnp.zeros_like(acc_ref)

    acc_ref[...] += jnp.dot(a_ref[...], b_ref[...],
                            preferred_element_type=jnp.float32)

    @pl.when(kk == pl.num_programs(2) - 1)
    def _finalize():
        out = acc_ref[...] * scale_ref[...] + bias_ref[...]
        o_ref[...] = out.astype(o_ref.dtype)


def _round_up(x, m):
    return ((x + m - 1) // m) * m


def _pick_tile(dim, tile_max, align):
    """Full-dim block when small (always legal), aligned fixed tile otherwise."""
    if dim <= tile_max:
        t = _round_up(dim, align)
        return t, t                       # (tile, padded dim)
    return tile_max, _round_up(dim, tile_max)


def pallas_scaled_matmul(a, b, row_scale=None, col_bias=None, *,
                         compute_dtype=jnp.bfloat16,
                         out_dtype=jnp.float32,
                         tm_max=256, tn_max=512, tk_max=512):
    """out[i, n] = row_scale[i] * sum_k a[i, k] * b[k, n] + col_bias[n]."""
    m, k = a.shape
    k2, n = b.shape
    assert k == k2, (a.shape, b.shape)

    if row_scale is None:
        row_scale = jnp.ones((m,), jnp.float32)
    if col_bias is None:
        col_bias = jnp.zeros((n,), jnp.float32)
    row_scale = jnp.asarray(row_scale, jnp.float32).reshape(m, 1)
    col_bias = jnp.asarray(col_bias, jnp.float32).reshape(1, n)

    tm, mp = _pick_tile(m, tm_max, 8)      # second-minor: multiple of 8
    tn, np_ = _pick_tile(n, tn_max, 128)   # minor: multiple of 128 -> lane-dense stores
    tk, kp = _pick_tile(k, tk_max, 128)

    # Zero padding is exact for matmul (padded K contributes 0, padded M/N rows/cols are
    # sliced away below).
    a_p = jnp.pad(a.astype(compute_dtype), ((0, mp - m), (0, kp - k)))
    b_p = jnp.pad(b.astype(compute_dtype), ((0, kp - k), (0, np_ - n)))
    s_p = jnp.pad(row_scale, ((0, mp - m), (0, 0)))
    c_p = jnp.pad(col_bias, ((0, 0), (0, np_ - n)))

    grid = (mp // tm, np_ // tn, kp // tk)

    out = pl.pallas_call(
        _mm_epilogue_kernel,
        out_shape=jax.ShapeDtypeStruct((mp, np_), out_dtype),
        grid_spec=pltpu.PrefetchScalarGridSpec(
            num_scalar_prefetch=0,
            grid=grid,
            in_specs=[
                pl.BlockSpec((tm, tk), lambda i, j, kk: (i, kk)),
                pl.BlockSpec((tk, tn), lambda i, j, kk: (kk, j)),
                pl.BlockSpec((tm, 1), lambda i, j, kk: (i, 0)),   # per-row scale
                pl.BlockSpec((1, tn), lambda i, j, kk: (0, j)),   # per-col bias
            ],
            out_specs=pl.BlockSpec((tm, tn), lambda i, j, kk: (i, j)),
            scratch_shapes=[pltpu.VMEM((tm, tn), jnp.float32)],
        ),
        compiler_params=pltpu.CompilerParams(
            dimension_semantics=("parallel", "parallel", "arbitrary"),
            vmem_limit_bytes=32 * 1024 * 1024,   # explicit budget; safe on v5e/v6e/v7x
        ),
    )(a_p, b_p, s_p, c_p)

    return out[:m, :n]


# ---------------------------------------------------------------------------
# NodeNetGNN_2 forward (dense bipartite graph representation)
# ---------------------------------------------------------------------------
def node_net_gnn2_forward(node_feat, net_feat, pin_feat, adj, params,
                          compute_dtype=jnp.bfloat16):
    """
    node_feat : [N_node, hidden_node_feats]
    net_feat  : [N_net,  hidden_net_feats]
    pin_feat  : [N_node, N_net, hidden_pin_feats]   dense 'pinned'-edge features
    adj       : [N_node, N_net] dense incidence (1.0 where node i pins net j)
                'pins' edges = adj.T (node->net), 'pinned' edges = adj (net->node)
    returns   : (node_out [N_node, out_node_feats], net_out [N_net, out_net_feats])
    """
    n_node, n_net = adj.shape
    dp = pin_feat.shape[-1]
    out_node = params["W_n1"].shape[1]

    adj = adj.astype(jnp.float32)
    d_node = jnp.maximum(jnp.sum(adj, axis=1), 1.0)     # degrees (clamp(min=1), DGL)
    d_net = jnp.maximum(jnp.sum(adj, axis=0), 1.0)
    s_node = jax.lax.rsqrt(d_node)
    s_net = jax.lax.rsqrt(d_net)

    mm = functools.partial(pallas_scaled_matmul, compute_dtype=compute_dtype)
    adj_t = adj.T

    # ---- hetero_conv_1: GraphConv on both relations (norm='both', bias) ----------
    p_node1 = mm(node_feat, params["W_p1"], row_scale=s_node)                 # [N_node, out_net]
    net1 = mm(adj_t, p_node1, row_scale=s_net, col_bias=params["b_p1"])       # [N_net,  out_net]

    p_net1 = mm(net_feat, params["W_n1"], row_scale=s_net)                    # [N_net,  out_node]
    node1 = mm(adj, p_net1, row_scale=s_node, col_bias=params["b_n1"])        # [N_node, out_node]

    # ---- hetero_conv_2, 'pins' relation: GraphConv -------------------------------
    p_node2 = mm(node1, params["W_p2"], row_scale=s_node)                     # [N_node, out_net]
    net2 = mm(adj_t, p_node2, row_scale=s_net, col_bias=params["b_p2"])       # [N_net,  out_net]

    # ---- hetero_conv_2, 'pinned' relation: NNConv (edge-conditioned, mean) -------
    k_feats = net1.shape[1]                                                   # hidden_net_feats
    # T'[j, p*O+o] = sum_k net1[j,k] * L_W[p, k*O+o]
    lw_t = params["L_W"].reshape(dp, k_feats, out_node)
    lw_t = jnp.transpose(lw_t, (1, 0, 2)).reshape(k_feats, dp * out_node)
    t_mat = mm(net1, lw_t)                                                    # [N_net, Dp*O]
    t_mat = t_mat.reshape(n_net * dp, out_node)                               # row idx j*Dp+p
    c_mat = mm(net1, params["L_b"].reshape(k_feats, out_node))                # [N_net, O]

    # Masked flattened pin features: q[i, j*Dp+p] = adj[i,j] * pin_feat[i,j,p]
    q = (adj[:, :, None] * pin_feat).reshape(n_node, n_net * dp)
    a_cat = jnp.concatenate([q, adj], axis=1)                                 # [N_node, N_net*(Dp+1)]
    w_cat = jnp.concatenate([t_mat, c_mat], axis=0)                           # [N_net*(Dp+1), O]
    node2 = mm(a_cat, w_cat, row_scale=1.0 / d_node, col_bias=params["b_nn"])

    return node2, net2


# ---------------------------------------------------------------------------
# Pure-JAX reference (independent formulation, incl. explicit per-edge NNConv)
# ---------------------------------------------------------------------------
def _ref_graphconv(adj_dst_src, h_src, w, b, d_src, d_dst):
    h = (h_src * (d_src ** -0.5)[:, None]) @ w
    return (adj_dst_src @ h) * (d_dst ** -0.5)[:, None] + b


def _ref_nnconv_mean(adj_dst_src, pin_feat, h_src, l_w, l_b, bias, d_dst):
    n_dst, n_src = adj_dst_src.shape
    k = h_src.shape[1]
    o = bias.shape[0]
    w_e = (pin_feat @ l_w + l_b).reshape(n_dst, n_src, k, o)    # per-edge weight (lin2_2)
    msg = jnp.einsum("jk,ijko->ijo", h_src, w_e)                # net1[j] @ W_e(i,j)
    msg = msg * adj_dst_src[:, :, None]
    return msg.sum(axis=1) / d_dst[:, None] + bias


def reference_forward(node_feat, net_feat, pin_feat, adj, params):
    d_node = jnp.maximum(adj.sum(axis=1), 1.0)
    d_net = jnp.maximum(adj.sum(axis=0), 1.0)
    net1 = _ref_graphconv(adj.T, node_feat, params["W_p1"], params["b_p1"], d_node, d_net)
    node1 = _ref_graphconv(adj, net_feat, params["W_n1"], params["b_n1"], d_net, d_node)
    net2 = _ref_graphconv(adj.T, node1, params["W_p2"], params["b_p2"], d_node, d_net)
    node2 = _ref_nnconv_mean(adj, pin_feat, net1, params["L_W"], params["L_b"],
                             params["b_nn"], d_node)
    return node2, net2


if __name__ == "__main__":
    # Small deterministic problem. NOTE: like the PyTorch module, layer-2 requires
    # out_node_feats == hidden_node_feats and out_net_feats == hidden_net_feats.
    N_NODE, N_NET = 64, 32
    HIDDEN_NODE = OUT_NODE = 16
    HIDDEN_NET = OUT_NET = 32
    HIDDEN_PIN = 8

    key = jax.random.PRNGKey(0)
    keys = jax.random.split(key, 16)

    node_feat = jax.random.normal(keys[0], (N_NODE, HIDDEN_NODE), jnp.float32)
    net_feat = jax.random.normal(keys[1], (N_NET, HIDDEN_NET), jnp.float32)

    # Random bipartite incidence; guarantee every node and every net has >=1 pin.
    adj = (jax.random.uniform(keys[2], (N_NODE, N_NET)) < 0.2).astype(jnp.float32)
    adj = jnp.maximum(adj, jax.nn.one_hot(jnp.arange(N_NODE) % N_NET, N_NET,
                                          dtype=jnp.float32))

    pin_feat = 0.5 * jax.random.normal(keys[3], (N_NODE, N_NET, HIDDEN_PIN), jnp.float32)
    pin_feat = pin_feat * adj[:, :, None]   # only real edges carry pin features

    params = {
        # hetero_conv_1
        "W_p1": 0.1 * jax.random.normal(keys[4], (HIDDEN_NODE, OUT_NET), jnp.float32),
        "b_p1": 0.01 * jax.random.normal(keys[5], (OUT_NET,), jnp.float32),
        "W_n1": 0.1 * jax.random.normal(keys[6], (HIDDEN_NET, OUT_NODE), jnp.float32),
        "b_n1": 0.01 * jax.random.normal(keys[7], (OUT_NODE,), jnp.float32),
        # hetero_conv_2 'pins' GraphConv
        "W_p2": 0.1 * jax.random.normal(keys[8], (OUT_NODE, OUT_NET), jnp.float32),
        "b_p2": 0.01 * jax.random.normal(keys[9], (OUT_NET,), jnp.float32),
        # hetero_conv_2 'pinned' NNConv: lin2_2 (Dp -> K*O) and NNConv bias
        "L_W": 0.1 * jax.random.normal(keys[10], (HIDDEN_PIN, HIDDEN_NET * OUT_NODE),
                                       jnp.float32),
        "L_b": 0.01 * jax.random.normal(keys[11], (HIDDEN_NET * OUT_NODE,), jnp.float32),
        "b_nn": 0.01 * jax.random.normal(keys[12], (OUT_NODE,), jnp.float32),
    }

    node_ref, net_ref = reference_forward(node_feat, net_feat, pin_feat, adj, params)

    # f32 kernel path: tight check of the semantics.
    node_f32, net_f32 = node_net_gnn2_forward(node_feat, net_feat, pin_feat, adj, params,
                                              compute_dtype=jnp.float32)
    node_f32, net_f32 = jax.block_until_ready((node_f32, net_f32))
    assert node_f32.shape == (N_NODE, OUT_NODE) and net_f32.shape == (N_NET, OUT_NET)
    assert jnp.allclose(node_f32, node_ref, atol=1e-3, rtol=1e-3)
    assert jnp.allclose(net_f32, net_ref, atol=1e-3, rtol=1e-3)

    # bf16-operand kernel path (the performance configuration): loose check.
    node_bf, net_bf = node_net_gnn2_forward(node_feat, net_feat, pin_feat, adj, params,
                                            compute_dtype=jnp.bfloat16)
    node_bf, net_bf = jax.block_until_ready((node_bf, net_bf))
    assert jnp.allclose(node_bf, node_ref, atol=1e-1, rtol=1e-1)
    assert jnp.allclose(net_bf, net_ref, atol=1e-1, rtol=1e-1)

    print("KERNEL_OK")
</pallas_src>

<mosaic_0001>
module attributes {stable_mosaic.version = 11 : i64} {
  func.func @_mm_epilogue_kernel(%arg0: i32, %arg1: i32, %arg2: i32, %arg3: memref<64x128xf32, #tpu.memory_space<vmem>>, %arg4: memref<128x128xf32, #tpu.memory_space<vmem>>, %arg5: memref<64x1xf32, #tpu.memory_space<vmem>>, %arg6: memref<1x128xf32, #tpu.memory_space<vmem>>, %arg7: memref<64x128xf32, #tpu.memory_space<vmem>>, %arg8: memref<64x128xf32, #tpu.memory_space<vmem>>) attributes {dimension_semantics = [#tpu.dimension_semantics<parallel>, #tpu.dimension_semantics<parallel>, #tpu.dimension_semantics<arbitrary>], iteration_bounds = array<i64: 1, 1, 1>, scalar_prefetch = 0 : i64, scratch_operands = 1 : i64, tpu.core_type = #tpu.core_type<tc>, window_params = [{transform_indices = @transform_0, window_bounds = array<i64: 64, 128>}, {transform_indices = @transform_1, window_bounds = array<i64: 128, 128>}, {transform_indices = @transform_2, window_bounds = array<i64: 64, 1>}, {transform_indices = @transform_3, window_bounds = array<i64: 1, 128>}, {transform_indices = @transform_4, window_bounds = array<i64: 64, 128>}]} {
    %c0_i32 = arith.constant 0 : i32
    %0 = arith.cmpi eq, %arg2, %c0_i32 : i32
    %1 = arith.extui %0 : i1 to i32
    %c0_i32_0 = arith.constant 0 : i32
    %2 = arith.cmpi ne, %1, %c0_i32_0 : i32
    scf.if %2 {
      %cst_10 = arith.constant 0.000000e+00 : f32
      %12 = vector.broadcast %cst_10 : f32 to vector<64x128xf32>
      %c0_11 = arith.constant 0 : index
      %c0_12 = arith.constant 0 : index
      %13 = vector.load %arg8[%c0_11, %c0_12] : memref<64x128xf32, #tpu.memory_space<vmem>>, vector<64x128xf32>
      tpu.vector_store %arg8[%c0_11, %c0_12], %12 {strides = array<i32>} : memref<64x128xf32, #tpu.memory_space<vmem>>, vector<64x128xf32>,
    } else {
    }
    %c0 = arith.constant 0 : index
    %c0_1 = arith.constant 0 : index
    %3 = vector.load %arg8[%c0, %c0_1] : memref<64x128xf32, #tpu.memory_space<vmem>>, vector<64x128xf32>
    %c0_2 = arith.constant 0 : index
    %c0_3 = arith.constant 0 : index
    %4 = vector.load %arg3[%c0_2, %c0_3] : memref<64x128xf32, #tpu.memory_space<vmem>>, vector<64x128xf32>
    %c0_4 = arith.constant 0 : index
    %c0_5 = arith.constant 0 : index
    %5 = vector.load %arg4[%c0_4, %c0_5] : memref<128x128xf32, #tpu.memory_space<vmem>>, vector<128x128xf32>
    %cst = arith.constant dense<0.000000e+00> : vector<64x128xf32>
    %6 = tpu.matmul %4, %5, %cst {dimension_numbers = #tpu.dot_dimension_numbers<[1], [0], [0], [1], [0, 0, 1, 1], [], []>, precision = #tpu.contract_precision<fp32>} : vector<64x128xf32>, vector<128x128xf32>, vector<64x128xf32> -> vector<64x128xf32>
    %7 = arith.addf %3, %6 : vector<64x128xf32>
    %c0_6 = arith.constant 0 : index
    %c0_7 = arith.constant 0 : index
    %8 = vector.load %arg8[%c0_6, %c0_7] : memref<64x128xf32, #tpu.memory_space<vmem>>, vector<64x128xf32>
    tpu.vector_store %arg8[%c0_6, %c0_7], %7 {strides = array<i32>} : memref<64x128xf32, #tpu.memory_space<vmem>>, vector<64x128xf32>,
    %c0_i32_8 = arith.constant 0 : i32
    %9 = arith.cmpi eq, %arg2, %c0_i32_8 : i32
    %10 = arith.extui %9 : i1 to i32
    %c0_i32_9 = arith.constant 0 : i32
    %11 = arith.cmpi ne, %10, %c0_i32_9 : i32
    scf.if %11 {
      %c0_10 = arith.constant 0 : index
      %c0_11 = arith.constant 0 : index
      %12 = vector.load %arg8[%c0_10, %c0_11] : memref<64x128xf32, #tpu.memory_space<vmem>>, vector<64x128xf32>
      %c0_12 = arith.constant 0 : index
      %c0_13 = arith.constant 0 : index
      %13 = vector.load %arg5[%c0_12, %c0_13] : memref<64x1xf32, #tpu.memory_space<vmem>>, vector<64x1xf32>
      %14 = vector.broadcast %13 : vector<64x1xf32> to vector<64x128xf32>
      %15 = arith.mulf %12, %14 : vector<64x128xf32>
      %c0_14 = arith.constant 0 : index
      %c0_15 = arith.constant 0 : index
      %16 = vector.load %arg6[%c0_14, %c0_15] : memref<1x128xf32, #tpu.memory_space<vmem>>, vector<1x128xf32>
      %17 = vector.broadcast %16 : vector<1x128xf32> to vector<64x128xf32>
      %18 = arith.addf %15, %17 : vector<64x128xf32>
      %c0_16 = arith.constant 0 : index
      %c0_17 = arith.constant 0 : index
      %19 = vector.load %arg7[%c0_16, %c0_17] : memref<64x128xf32, #tpu.memory_space<vmem>>, vector<64x128xf32>
      tpu.vector_store %arg7[%c0_16, %c0_17], %18 {strides = array<i32>} : memref<64x128xf32, #tpu.memory_space<vmem>>, vector<64x128xf32>,
    } else {
    }
    return
  }
  func.func @transform_0(%arg0: i32, %arg1: i32, %arg2: i32) -> (i32, i32) {
    %c0_i32 = arith.constant 0 : i32
    return %arg0, %arg2 : i32, i32
  }
  func.func @transform_1(%arg0: i32, %arg1: i32, %arg2: i32) -> (i32, i32) {
    %c0_i32 = arith.constant 0 : i32
    return %arg2, %arg1 : i32, i32
  }
  func.func @transform_2(%arg0: i32, %arg1: i32, %arg2: i32) -> (i32, i32) {
    %c0_i32 = arith.constant 0 : i32
    %c0_i32_0 = arith.constant 0 : i32
    return %arg0, %c0_i32 : i32, i32
  }
  func.func @transform_3(%arg0: i32, %arg1: i32, %arg2: i32) -> (i32, i32) {
    %c0_i32 = arith.constant 0 : i32
    %c0_i32_0 = arith.constant 0 : i32
    return %c0_i32, %arg1 : i32, i32
  }
  func.func @transform_4(%arg0: i32, %arg1: i32, %arg2: i32) -> (i32, i32) {
    %c0_i32 = arith.constant 0 : i32
    return %arg0, %arg1 : i32, i32
  }
}

</mosaic_0001>

<llo_original>
// kernel: tpu_custom_call.1
$region0: #{tpu_custom_call.1}
  #allocation0 [shape = 'u32[]', space=smem, size = 0x4, offset = 0x4, fixed_abs, tag = 'smem constant byte address 0x4 - core index']
  #allocation1 [shape = 'u32[144,128]{1,0:T(1,128)}', space=vmem, size = 0x12000, scoped, tag = 'internal scratch']
  #allocation2 [shape = 'f32[64,128]{1,0:T(8,128)}', space=vmem, size = 0x8000, scoped, tag = 'scratch operand']
  %s0 = inlined_call_operand.vmem [shape: f32[64,128], index: 0, kind: input, shape index: {}]
  %s1 = inlined_call_operand.hbm [shape: f32[128,128], index: 1, kind: input, shape index: {}]
  %s2 = inlined_call_operand.vmem [shape: f32[64,1], index: 2, kind: input, shape index: {}]
  %s3 = inlined_call_operand.vmem [shape: f32[1,128], index: 3, kind: input, shape index: {}]
  %s4 = inlined_call_operand.hbm [shape: f32[64,128], index: 4, kind: output, shape index: {}]
  %s5 = sld [smem:[#allocation0]]
  $region38: #{tpu_custom_call.1} parent=0
    _
  %s7 = ssub.s32 1, %s5
  %s8 = scalar_select 0, %s7, %s5
  $region1: #{tpu_custom_call.1} parent=0
    #allocation3 [shape = 'u8[65536]{0}', space=vmem, size = 0x10000, scoped, tag = 'input window, operand 1, single buffered']
    #allocation4 [shape = 's32[1]{0}', space=sflag, size = 0x4, scoped, tag = 'scoped memory for tpu_custom_call.1']
    #allocation5 [shape = 's32[1]{0}', space=sflag, size = 0x4, scoped, tag = 'scoped memory for tpu_custom_call.1']
    #allocation6 [shape = 'u8[32768]{0}', space=vmem, size = 0x8000, scoped, tag = 'output window, operand 0, single buffered']
    %9 = vsyncpa [#allocation4], 0
    %10 = vsyncpa [#allocation5], 0
    // Predicated region
    $region2: #{tpu_custom_call.1} parent=1 // pred_check
      _
    $region3: #{tpu_custom_call.1} parent=1 // pred_check_branch
      %12 = sbr.rel (0) target = $region5
    $region4: #{tpu_custom_call.1} parent=1 // pred_region
      _
    $region5: #{tpu_custom_call.1} parent=1 // pred_fallthru
      _
    // Predicated region
    $region6: #{tpu_custom_call.1} parent=1 // pred_check
      _
    $region7: #{tpu_custom_call.1} parent=1 // pred_check_branch
      %14 = sbr.rel (0) target = $region9
    $region8: #{tpu_custom_call.1} parent=1 // pred_region
      %s16 = ssub.s32 2048, 2048
      %17 = vsyncadd [#allocation4], %s16
      %s18 = sshll.u32 [#allocation3], 4
      %s19 = int_to_ptr.vmem [resolvable:$true] %s18
      %24 = dma.hbm_to_vmem [thread:$0]  %s1, 2048, %s19, [#allocation4], 128, 128, 8
    $region9: #{tpu_custom_call.1} parent=1 // pred_fallthru
      _
    // Predicated region
    $region10: #{tpu_custom_call.1} parent=1 // pred_check
      _
    $region11: #{tpu_custom_call.1} parent=1 // pred_check_branch
      %26 = sbr.rel (0) target = $region13
    $region12: #{tpu_custom_call.1} parent=1 // pred_region
      _
    $region13: #{tpu_custom_call.1} parent=1 // pred_fallthru
      _
    // Predicated region
    $region14: #{tpu_custom_call.1} parent=1 // pred_check
      _
    $region15: #{tpu_custom_call.1} parent=1 // pred_check_branch
      %28 = sbr.rel (0) target = $region17
    $region16: #{tpu_custom_call.1} parent=1 // pred_region
      _
    $region17: #{tpu_custom_call.1} parent=1 // pred_fallthru
      _
    // Predicated region
    $region18: #{tpu_custom_call.1} parent=1 // pred_check
      _
    $region19: #{tpu_custom_call.1} parent=1 // pred_check_branch
      %30 = sbr.rel (0) target = $region21
    $region20: #{tpu_custom_call.1} parent=1 // pred_region
      %31 = dma.done [#allocation4], 2048
    $region21: #{tpu_custom_call.1} parent=1 // pred_fallthru
      _
    %p32 = scmp.eq.s32.totalorder 0, 0
    // Predicated region
    $region22: #{tpu_custom_call.1} parent=1 // pred_check
      %p33 = pneg %p32
    $region23: #{tpu_custom_call.1} parent=1 // pred_check_branch
      %35 = sbr.rel (%p33) target = $region25
    $region24: #{tpu_custom_call.1} parent=1 // pred_region
      %36 = vst [vmem:[#allocation2] sm:$0xff] 0.0
      %37 = vst [vmem:[#allocation2 + $0x8] sm:$0xff] 0.0
      %38 = vst [vmem:[#allocation2 + $0x10] sm:$0xff] 0.0
      %39 = vst [vmem:[#allocation2 + $0x18] sm:$0xff] 0.0
      %40 = vst [vmem:[#allocation2 + $0x20] sm:$0xff] 0.0
      %41 = vst [vmem:[#allocation2 + $0x28] sm:$0xff] 0.0
      %42 = vst [vmem:[#allocation2 + $0x30] sm:$0xff] 0.0
      %43 = vst [vmem:[#allocation2 + $0x38] sm:$0xff] 0.0
    $region25: #{tpu_custom_call.1} parent=1 // pred_fallthru
      _
    %v44 = vld [vmem:[#allocation2] sm:$0xff]
    %v45 = vld [vmem:[#allocation2 + $0x8] sm:$0xff]
    %v46 = vld [vmem:[#allocation2 + $0x10] sm:$0xff]
    %v47 = vld [vmem:[#allocation2 + $0x18] sm:$0xff]
    %v48 = vld [vmem:[#allocation2 + $0x20] sm:$0xff]
    %v49 = vld [vmem:[#allocation2 + $0x28] sm:$0xff]
    %v50 = vld [vmem:[#allocation2 + $0x30] sm:$0xff]
    %v51 = vld [vmem:[#allocation2 + $0x38] sm:$0xff]
    %v52 = vld [vmem:[%s0] sm:$0xff]
    %v53 = vld [vmem:[%s0 + $0x8] sm:$0xff]
    %v54 = vld [vmem:[%s0 + $0x10] sm:$0xff]
    %v55 = vld [vmem:[%s0 + $0x18] sm:$0xff]
    %v56 = vld [vmem:[%s0 + $0x20] sm:$0xff]
    %v57 = vld [vmem:[%s0 + $0x28] sm:$0xff]
    %v58 = vld [vmem:[%s0 + $0x30] sm:$0xff]
    %v59 = vld [vmem:[%s0 + $0x38] sm:$0xff]
    %v60 = vld [vmem:[#allocation3] sm:$0xff]
    %v61 = vld [vmem:[#allocation3 + $0x8] sm:$0xff]
    %v62 = vld [vmem:[#allocation3 + $0x10] sm:$0xff]
    %v63 = vld [vmem:[#allocation3 + $0x18] sm:$0xff]
    %v64 = vld [vmem:[#allocation3 + $0x20] sm:$0xff]
    %v65 = vld [vmem:[#allocation3 + $0x28] sm:$0xff]
    %v66 = vld [vmem:[#allocation3 + $0x30] sm:$0xff]
    %v67 = vld [vmem:[#allocation3 + $0x38] sm:$0xff]
    %v68 = vld [vmem:[#allocation3 + $0x40] sm:$0xff]
    %v69 = vld [vmem:[#allocation3 + $0x48] sm:$0xff]
    %v70 = vld [vmem:[#allocation3 + $0x50] sm:$0xff]
    %v71 = vld [vmem:[#allocation3 + $0x58] sm:$0xff]
    %v72 = vld [vmem:[#allocation3 + $0x60] sm:$0xff]
    %v73 = vld [vmem:[#allocation3 + $0x68] sm:$0xff]
    %v74 = vld [vmem:[#allocation3 + $0x70] sm:$0xff]
    %v75 = vld [vmem:[#allocation3 + $0x78] sm:$0xff]
    %76 = vmatprep.subr.mxu0 0.0
    %v77 = vand.u32 %v75, 4294901760
    %78 = vmatpush1.msra.mxu0 %v77
    %79 = vmatprep.subr.mxu0 0.0
    %v80 = vand.u32 %v74, 4294901760
    %81 = vmatpush1.msra.mxu0 %v80
    %82 = vmatprep.subr.mxu0 0.0
    %v83 = vand.u32 %v73, 4294901760
    %84 = vmatpush1.msra.mxu0 %v83
    %85 = vmatprep.subr.mxu0 0.0
    %v86 = vand.u32 %v72, 4294901760
    %87 = vmatpush1.msra.mxu0 %v86
    %88 = vmatprep.subr.mxu0 0.0
    %v89 = vand.u32 %v71, 4294901760
    %90 = vmatpush1.msra.mxu0 %v89
    %91 = vmatprep.subr.mxu0 0.0
    %v92 = vand.u32 %v70, 4294901760
    %93 = vmatpush1.msra.mxu0 %v92
    %94 = vmatprep.subr.mxu0 0.0
    %v95 = vand.u32 %v69, 4294901760
    %96 = vmatpush1.msra.mxu0 %v95
    %97 = vmatprep.subr.mxu0 0.0
    %v98 = vand.u32 %v68, 4294901760
    %99 = vmatpush1.msra.mxu0 %v98
    %100 = vmatprep.subr.mxu0 0.0
    %v101 = vand.u32 %v67, 4294901760
    %102 = vmatpush1.msra.mxu0 %v101
    %103 = vmatprep.subr.mxu0 0.0
    %v104 = vand.u32 %v66, 4294901760
    %105 = vmatpush1.msra.mxu0 %v104
    %106 = vmatprep.subr.mxu0 0.0
    %v107 = vand.u32 %v65, 4294901760
    %108 = vmatpush1.msra.mxu0 %v107
    %109 = vmatprep.subr.mxu0 0.0
    %v110 = vand.u32 %v64, 4294901760
    %111 = vmatpush1.msra.mxu0 %v110
    %112 = vmatprep.subr.mxu0 0.0
    %v113 = vand.u32 %v63, 4294901760
    %114 = vmatpush1.msra.mxu0 %v113
    %115 = vmatprep.subr.mxu0 0.0
    %v116 = vand.u32 %v62, 4294901760
    %117 = vmatpush1.msra.mxu0 %v116
    %118 = vmatprep.subr.mxu0 0.0
    %v119 = vand.u32 %v61, 4294901760
    %120 = vmatpush1.msra.mxu0 %v119
    %121 = vmatprep.subr.mxu0 0.0
    %v122 = vand.u32 %v60, 4294901760
    %123 = vmatpush1.msra.mxu0 %v122
    %124 = vmatprep.subr.mxu0 0.0
    %125 = vmatpush2.msra.mxu0 0.0
    %126 = vmatprep.subr.mxu0 0.0
    %127 = vmatpush2.msra.mxu0 0.0
    %128 = vmatprep.subr.mxu0 0.0
    %129 = vmatpush2.msra.mxu0 0.0
    %130 = vmatprep.subr.mxu0 0.0
    %131 = vmatpush2.msra.mxu0 0.0
    %132 = vmatprep.subr.mxu0 0.0
    %133 = vmatpush2.msra.mxu0 0.0
    %134 = vmatprep.subr.mxu0 0.0
    %135 = vmatpush2.msra.mxu0 0.0
    %136 = vmatprep.subr.mxu0 0.0
    %137 = vmatpush2.msra.mxu0 0.0
    %138 = vmatprep.subr.mxu0 0.0
    %139 = vmatpush2.msra.mxu0 0.0
    %140 = vmatprep.subr.mxu0 0.0
    %141 = vmatpush2.msra.mxu0 0.0
    %142 = vmatprep.subr.mxu0 0.0
    %143 = vmatpush2.msra.mxu0 0.0
    %144 = vmatprep.subr.mxu0 0.0
    %145 = vmatpush2.msra.mxu0 0.0
    %146 = vmatprep.subr.mxu0 0.0
    %147 = vmatpush2.msra.mxu0 0.0
    %148 = vmatprep.subr.mxu0 0.0
    %149 = vmatpush2.msra.mxu0 0.0
    %150 = vmatprep.subr.mxu0 0.0
    %151 = vmatpush2.msra.mxu0 0.0
    %152 = vmatprep.subr.mxu0 0.0
    %153 = vmatpush2.msra.mxu0 0.0
    %154 = vmatprep.subr.mxu0 0.0
    %155 = vmatpush2.msra.mxu0 0.0
    %156 = vmatprep.mubr.f32.mxu0 0.0
    %v157 = vand.u32 %v52, 4294901760
    %v158 = vsub.f32 %v52, %v157
    %v159 = vand.u32 %v158, 4294901760
    %v160 = vsub.f32 %v158, %v159
    %v161 = vand.u32 %v160, 4294901760
    %162 = vmatmul.mubr.f32.gmra.mxu0 %v161
    %v163 = vpop.f32.mrf.mxu0
    %v164 = vadd.f32 0.0, %v163
    %v165 = vpop.f32.mrf.mxu0
    %166 = vmatprep.mubr.f32.mxu0 0.0
    %v167 = vand.u32 %v53, 4294901760
    %v168 = vsub.f32 %v53, %v167
    %v169 = vand.u32 %v168, 4294901760
    %v170 = vsub.f32 %v168, %v169
    %v171 = vand.u32 %v170, 4294901760
    %172 = vmatmul.mubr.f32.gmra.mxu0 %v171
    %v173 = vpop.f32.mrf.mxu0
    %v174 = vadd.f32 0.0, %v173
    %v175 = vpop.f32.mrf.mxu0
    %176 = vmatprep.mubr.f32.mxu0 0.0
    %v177 = vand.u32 %v54, 4294901760
    %v178 = vsub.f32 %v54, %v177
    %v179 = vand.u32 %v178, 4294901760
    %v180 = vsub.f32 %v178, %v179
    %v181 = vand.u32 %v180, 4294901760
    %182 = vmatmul.mubr.f32.gmra.mxu0 %v181
    %v183 = vpop.f32.mrf.mxu0
    %v184 = vadd.f32 0.0, %v183
    %v185 = vpop.f32.mrf.mxu0
    %186 = vmatprep.mubr.f32.mxu0 0.0
    %v187 = vand.u32 %v55, 4294901760
    %v188 = vsub.f32 %v55, %v187
    %v189 = vand.u32 %v188, 4294901760
    %v190 = vsub.f32 %v188, %v189
    %v191 = vand.u32 %v190, 4294901760
    %192 = vmatmul.mubr.f32.gmra.mxu0 %v191
    %v193 = vpop.f32.mrf.mxu0
    %v194 = vadd.f32 0.0, %v193
    %v195 = vpop.f32.mrf.mxu0
    %196 = vmatprep.mubr.f32.mxu0 0.0
    %v197 = vand.u32 %v56, 4294901760
    %v198 = vsub.f32 %v56, %v197
    %v199 = vand.u32 %v198, 4294901760
    %v200 = vsub.f32 %v198, %v199
    %v201 = vand.u32 %v200, 4294901760
    %202 = vmatmul.mubr.f32.gmra.mxu0 %v201
    %v203 = vpop.f32.mrf.mxu0
    %v204 = vadd.f32 0.0, %v203
    %v205 = vpop.f32.mrf.mxu0
    %206 = vmatprep.mubr.f32.mxu0 0.0
    %v207 = vand.u32 %v57, 4294901760
    %v208 = vsub.f32 %v57, %v207
    %v209 = vand.u32 %v208, 4294901760
    %v210 = vsub.f32 %v208, %v209
    %v211 = vand.u32 %v210, 4294901760
    %212 = vmatmul.mubr.f32.gmra.mxu0 %v211
    %v213 = vpop.f32.mrf.mxu0
    %v214 = vadd.f32 0.0, %v213
    %v215 = vpop.f32.mrf.mxu0
    %216 = vmatprep.mubr.f32.mxu0 0.0
    %v217 = vand.u32 %v58, 4294901760
    %v218 = vsub.f32 %v58, %v217
    %v219 = vand.u32 %v218, 4294901760
    %v220 = vsub.f32 %v218, %v219
    %v221 = vand.u32 %v220, 4294901760
    %222 = vmatmul.mubr.f32.gmra.mxu0 %v221
    %v223 = vpop.f32.mrf.mxu0
    %v224 = vadd.f32 0.0, %v223
    %v225 = vpop.f32.mrf.mxu0
    %226 = vmatprep.mubr.f32.mxu0 0.0
    %v227 = vand.u32 %v59, 4294901760
    %v228 = vsub.f32 %v59, %v227
    %v229 = vand.u32 %v228, 4294901760
    %v230 = vsub.f32 %v228, %v229
    %v231 = vand.u32 %v230, 4294901760
    %232 = vmatmul.mubr.f32.gmra.mxu0 %v231
    %v233 = vpop.f32.mrf.mxu0
    %v234 = vadd.f32 0.0, %v233
    %v235 = vpop.f32.mrf.mxu0
    %236 = vdwg.mxu0
    %237 = vmatprep.subr.mxu0 0.0
    %v238 = vand.u32 %v75, 4294901760
    %v239 = vsub.f32 %v75, %v238
    %v240 = vand.u32 %v239, 4294901760
    %v241 = vsub.f32 %v239, %v240
    %v242 = vand.u32 %v241, 4294901760
    %243 = vmatpush1.msra.mxu0 %v242
    %244 = vmatprep.subr.mxu0 0.0
    %v245 = vand.u32 %v74, 4294901760
    %v246 = vsub.f32 %v74, %v245
    %v247 = vand.u32 %v246, 4294901760
    %v248 = vsub.f32 %v246, %v247
    %v249 = vand.u32 %v248, 4294901760
    %250 = vmatpush1.msra.mxu0 %v249
    %251 = vmatprep.subr.mxu0 0.0
    %v252 = vand.u32 %v73, 4294901760
    %v253 = vsub.f32 %v73, %v252
    %v254 = vand.u32 %v253, 4294901760
    %v255 = vsub.f32 %v253, %v254
    %v256 = vand.u32 %v255, 4294901760
    %257 = vmatpush1.msra.mxu0 %v256
    %258 = vmatprep.subr.mxu0 0.0
    %v259 = vand.u32 %v72, 4294901760
    %v260 = vsub.f32 %v72, %v259
    %v261 = vand.u32 %v260, 4294901760
    %v262 = vsub.f32 %v260, %v261
    %v263 = vand.u32 %v262, 4294901760
    %264 = vmatpush1.msra.mxu0 %v263
    %265 = vmatprep.subr.mxu0 0.0
    %v266 = vand.u32 %v71, 4294901760
    %v267 = vsub.f32 %v71, %v266
    %v268 = vand.u32 %v267, 4294901760
    %v269 = vsub.f32 %v267, %v268
    %v270 = vand.u32 %v269, 4294901760
    %271 = vmatpush1.msra.mxu0 %v270
    %272 = vmatprep.subr.mxu0 0.0
    %v273 = vand.u32 %v70, 4294901760
    %v274 = vsub.f32 %v70, %v273
    %v275 = vand.u32 %v274, 4294901760
    %v276 = vsub.f32 %v274, %v275
    %v277 = vand.u32 %v276, 4294901760
    %278 = vmatpush1.msra.mxu0 %v277
    %279 = vmatprep.subr.mxu0 0.0
    %v280 = vand.u32 %v69, 4294901760
    %v281 = vsub.f32 %v69, %v280
    %v282 = vand.u32 %v281, 4294901760
    %v283 = vsub.f32 %v281, %v282
    %v284 = vand.u32 %v283, 4294901760
    %285 = vmatpush1.msra.mxu0 %v284
    %286 = vmatprep.subr.mxu0 0.0
    %v287 = vand.u32 %v68, 4294901760
    %v288 = vsub.f32 %v68, %v287
    %v289 = vand.u32 %v288, 4294901760
    %v290 = vsub.f32 %v288, %v289
    %v291 = vand.u32 %v290, 4294901760
    %292 = vmatpush1.msra.mxu0 %v291
    %293 = vmatprep.subr.mxu0 0.0
    %v294 = vand.u32 %v67, 4294901760
    %v295 = vsub.f32 %v67, %v294
    %v296 = vand.u32 %v295, 4294901760
    %v297 = vsub.f32 %v295, %v296
    %v298 = vand.u32 %v297, 4294901760
    %299 = vmatpush1.msra.mxu0 %v298
    %300 = vmatprep.subr.mxu0 0.0
    %v301 = vand.u32 %v66, 4294901760
    %v302 = vsub.f32 %v66, %v301
    %v303 = vand.u32 %v302, 4294901760
    %v304 = vsub.f32 %v302, %v303
    %v305 = vand.u32 %v304, 4294901760
    %306 = vmatpush1.msra.mxu0 %v305
    %307 = vmatprep.subr.mxu0 0.0
    %v308 = vand.u32 %v65, 4294901760
    %v309 = vsub.f32 %v65, %v308
    %v310 = vand.u32 %v309, 4294901760
    %v311 = vsub.f32 %v309, %v310
    %v312 = vand.u32 %v311, 4294901760
    %313 = vmatpush1.msra.mxu0 %v312
    %314 = vmatprep.subr.mxu0 0.0
    %v315 = vand.u32 %v64, 4294901760
    %v316 = vsub.f32 %v64, %v315
    %v317 = vand.u32 %v316, 4294901760
    %v318 = vsub.f32 %v316, %v317
    %v319 = vand.u32 %v318, 4294901760
    %320 = vmatpush1.msra.mxu0 %v319
    %321 = vmatprep.subr.mxu0 0.0
    %v322 = vand.u32 %v63, 4294901760
    %v323 = vsub.f32 %v63, %v322
    %v324 = vand.u32 %v323, 4294901760
    %v325 = vsub.f32 %v323, %v324
    %v326 = vand.u32 %v325, 4294901760
    %327 = vmatpush1.msra.mxu0 %v326
    %328 = vmatprep.subr.mxu0 0.0
    %v329 = vand.u32 %v62, 4294901760
    %v330 = vsub.f32 %v62, %v329
    %v331 = vand.u32 %v330, 4294901760
    %v332 = vsub.f32 %v330, %v331
    %v333 = vand.u32 %v332, 4294901760
    %334 = vmatpush1.msra.mxu0 %v333
    %335 = vmatprep.subr.mxu0 0.0
    %v336 = vand.u32 %v61, 4294901760
    %v337 = vsub.f32 %v61, %v336
    %v338 = vand.u32 %v337, 4294901760
    %v339 = vsub.f32 %v337, %v338
    %v340 = vand.u32 %v339, 4294901760
    %341 = vmatpush1.msra.mxu0 %v340
    %342 = vmatprep.subr.mxu0 0.0
    %v343 = vand.u32 %v60, 4294901760
    %v344 = vsub.f32 %v60, %v343
    %v345 = vand.u32 %v344, 4294901760
    %v346 = vsub.f32 %v344, %v345
    %v347 = vand.u32 %v346, 4294901760
    %348 = vmatpush1.msra.mxu0 %v347
    %349 = vmatprep.subr.mxu0 0.0
    %350 = vmatpush2.msra.mxu0 0.0
    %351 = vmatprep.subr.mxu0 0.0
    %352 = vmatpush2.msra.mxu0 0.0
    %353 = vmatprep.subr.mxu0 0.0
    %354 = vmatpush2.msra.mxu0 0.0
    %355 = vmatprep.subr.mxu0 0.0
    %356 = vmatpush2.msra.mxu0 0.0
    %357 = vmatprep.subr.mxu0 0.0
    %358 = vmatpush2.msra.mxu0 0.0
    %359 = vmatprep.subr.mxu0 0.0
    %360 = vmatpush2.msra.mxu0 0.0
    %361 = vmatprep.subr.mxu0 0.0
    %362 = vmatpush2.msra.mxu0 0.0
    %363 = vmatprep.subr.mxu0 0.0
    %364 = vmatpush2.msra.mxu0 0.0
    %365 = vmatprep.subr.mxu0 0.0
    %366 = vmatpush2.msra.mxu0 0.0
    %367 = vmatprep.subr.mxu0 0.0
    %368 = vmatpush2.msra.mxu0 0.0
    %369 = vmatprep.subr.mxu0 0.0
    %370 = vmatpush2.msra.mxu0 0.0
    %371 = vmatprep.subr.mxu0 0.0
    %372 = vmatpush2.msra.mxu0 0.0
    %373 = vmatprep.subr.mxu0 0.0
    %374 = vmatpush2.msra.mxu0 0.0
    %375 = vmatprep.subr.mxu0 0.0
    %376 = vmatpush2.msra.mxu0 0.0
    %377 = vmatprep.subr.mxu0 0.0
    %378 = vmatpush2.msra.mxu0 0.0
    %379 = vmatprep.subr.mxu0 0.0
    %380 = vmatpush2.msra.mxu0 0.0
    %381 = vmatprep.mubr.f32.mxu0 0.0
    %v382 = vand.u32 %v52, 4294901760
    %383 = vmatmul.mubr.f32.gmra.mxu0 %v382
    %v384 = vpop.f32.mrf.mxu0
    %v385 = vadd.f32 %v164, %v384
    %v386 = vpop.f32.mrf.mxu0
    %387 = vmatprep.mubr.f32.mxu0 0.0
    %v388 = vand.u32 %v53, 4294901760
    %389 = vmatmul.mubr.f32.gmra.mxu0 %v388
    %v390 = vpop.f32.mrf.mxu0
    %v391 = vadd.f32 %v174, %v390
    %v392 = vpop.f32.mrf.mxu0
    %393 = vmatprep.mubr.f32.mxu0 0.0
    %v394 = vand.u32 %v54, 4294901760
    %395 = vmatmul.mubr.f32.gmra.mxu0 %v394
    %v396 = vpop.f32.mrf.mxu0
    %v397 = vadd.f32 %v184, %v396
    %v398 = vpop.f32.mrf.mxu0
    %399 = vmatprep.mubr.f32.mxu0 0.0
    %v400 = vand.u32 %v55, 4294901760
    %401 = vmatmul.mubr.f32.gmra.mxu0 %v400
    %v402 = vpop.f32.mrf.mxu0
    %v403 = vadd.f32 %v194, %v402
    %v404 = vpop.f32.mrf.mxu0
    %405 = vmatprep.mubr.f32.mxu0 0.0
    %v406 = vand.u32 %v56, 4294901760
    %407 = vmatmul.mubr.f32.gmra.mxu0 %v406
    %v408 = vpop.f32.mrf.mxu0
    %v409 = vadd.f32 %v204, %v408
    %v410 = vpop.f32.mrf.mxu0
    %411 = vmatprep.mubr.f32.mxu0 0.0
    %v412 = vand.u32 %v57, 4294901760
    %413 = vmatmul.mubr.f32.gmra.mxu0 %v412
    %v414 = vpop.f32.mrf.mxu0
    %v415 = vadd.f32 %v214, %v414
    %v416 = vpop.f32.mrf.mxu0
    %417 = vmatprep.mubr.f32.mxu0 0.0
    %v418 = vand.u32 %v58, 4294901760
    %419 = vmatmul.mubr.f32.gmra.mxu0 %v418
    %v420 = vpop.f32.mrf.mxu0
    %v421 = vadd.f32 %v224, %v420
    %v422 = vpop.f32.mrf.mxu0
    %423 = vmatprep.mubr.f32.mxu0 0.0
    %v424 = vand.u32 %v59, 4294901760
    %425 = vmatmul.mubr.f32.gmra.mxu0 %v424
    %v426 = vpop.f32.mrf.mxu0
    %v427 = vadd.f32 %v234, %v426
    %v428 = vpop.f32.mrf.mxu0
    %429 = vdwg.mxu0
    %430 = vmatprep.subr.mxu0 0.0
    %v431 = vand.u32 %v75, 4294901760
    %v432 = vsub.f32 %v75, %v431
    %433 = vmatpush1.msra.mxu0 %v432
    %434 = vmatprep.subr.mxu0 0.0
    %v435 = vand.u32 %v74, 4294901760
    %v436 = vsub.f32 %v74, %v435
    %437 = vmatpush1.msra.mxu0 %v436
    %438 = vmatprep.subr.mxu0 0.0
    %v439 = vand.u32 %v73, 4294901760
    %v440 = vsub.f32 %v73, %v439
    %441 = vmatpush1.msra.mxu0 %v440
    %442 = vmatprep.subr.mxu0 0.0
    %v443 = vand.u32 %v72, 4294901760
    %v444 = vsub.f32 %v72, %v443
    %445 = vmatpush1.msra.mxu0 %v444
    %446 = vmatprep.subr.mxu0 0.0
    %v447 = vand.u32 %v71, 4294901760
    %v448 = vsub.f32 %v71, %v447
    %449 = vmatpush1.msra.mxu0 %v448
    %450 = vmatprep.subr.mxu0 0.0
    %v451 = vand.u32 %v70, 4294901760
    %v452 = vsub.f32 %v70, %v451
    %453 = vmatpush1.msra.mxu0 %v452
    %454 = vmatprep.subr.mxu0 0.0
    %v455 = vand.u32 %v69, 4294901760
    %v456 = vsub.f32 %v69, %v455
    %457 = vmatpush1.msra.mxu0 %v456
    %458 = vmatprep.subr.mxu0 0.0
    %v459 = vand.u32 %v68, 4294901760
    %v460 = vsub.f32 %v68, %v459
    %461 = vmatpush1.msra.mxu0 %v460
    %462 = vmatprep.subr.mxu0 0.0
    %v463 = vand.u32 %v67, 4294901760
    %v464 = vsub.f32 %v67, %v463
    %465 = vmatpush1.msra.mxu0 %v464
    %466 = vmatprep.subr.mxu0 0.0
    %v467 = vand.u32 %v66, 4294901760
    %v468 = vsub.f32 %v66, %v467
    %469 = vmatpush1.msra.mxu0 %v468
    %470 = vmatprep.subr.mxu0 0.0
    %v471 = vand.u32 %v65, 4294901760
    %v472 = vsub.f32 %v65, %v471
    %473 = vmatpush1.msra.mxu0 %v472
    %474 = vmatprep.subr.mxu0 0.0
    %v475 = vand.u32 %v64, 4294901760
    %v476 = vsub.f32 %v64, %v475
    %477 = vmatpush1.msra.mxu0 %v476
    %478 = vmatprep.subr.mxu0 0.0
    %v479 = vand.u32 %v63, 4294901760
    %v480 = vsub.f32 %v63, %v479
    %481 = vmatpush1.msra.mxu0 %v480
    %482 = vmatprep.subr.mxu0 0.0
    %v483 = vand.u32 %v62, 4294901760
    %v484 = vsub.f32 %v62, %v483
    %485 = vmatpush1.msra.mxu0 %v484
    %486 = vmatprep.subr.mxu0 0.0
    %v487 = vand.u32 %v61, 4294901760
    %v488 = vsub.f32 %v61, %v487
    %489 = vmatpush1.msra.mxu0 %v488
    %490 = vmatprep.subr.mxu0 0.0
    %v491 = vand.u32 %v60, 4294901760
    %v492 = vsub.f32 %v60, %v491
    %493 = vmatpush1.msra.mxu0 %v492
    %494 = vmatprep.subr.mxu0 0.0
    %495 = vmatpush2.msra.mxu0 0.0
    %496 = vmatprep.subr.mxu0 0.0
    %497 = vmatpush2.msra.mxu0 0.0
    %498 = vmatprep.subr.mxu0 0.0
    %499 = vmatpush2.msra.mxu0 0.0
    %500 = vmatprep.subr.mxu0 0.0
    %501 = vmatpush2.msra.mxu0 0.0
    %502 = vmatprep.subr.mxu0 0.0
    %503 = vmatpush2.msra.mxu0 0.0
    %504 = vmatprep.subr.mxu0 0.0
    %505 = vmatpush2.msra.mxu0 0.0
    %506 = vmatprep.subr.mxu0 0.0
    %507 = vmatpush2.msra.mxu0 0.0
    %508 = vmatprep.subr.mxu0 0.0
    %509 = vmatpush2.msra.mxu0 0.0
    %510 = vmatprep.subr.mxu0 0.0
    %511 = vmatpush2.msra.mxu0 0.0
    %512 = vmatprep.subr.mxu0 0.0
    %513 = vmatpush2.msra.mxu0 0.0
    %514 = vmatprep.subr.mxu0 0.0
    %515 = vmatpush2.msra.mxu0 0.0
    %516 = vmatprep.subr.mxu0 0.0
    %517 = vmatpush2.msra.mxu0 0.0
    %518 = vmatprep.subr.mxu0 0.0
    %519 = vmatpush2.msra.mxu0 0.0
    %520 = vmatprep.subr.mxu0 0.0
    %521 = vmatpush2.msra.mxu0 0.0
    %522 = vmatprep.subr.mxu0 0.0
    %523 = vmatpush2.msra.mxu0 0.0
    %524 = vmatprep.subr.mxu0 0.0
    %525 = vmatpush2.msra.mxu0 0.0
    %526 = vmatprep.mubr.f32.mxu0 0.0
    %v527 = vand.u32 %v52, 4294901760
    %v528 = vsub.f32 %v52, %v527
    %529 = vmatmul.mubr.f32.gmra.mxu0 %v528
    %v530 = vpop.f32.mrf.mxu0
    %v531 = vadd.f32 %v385, %v530
    %v532 = vpop.f32.mrf.mxu0
    %533 = vmatprep.mubr.f32.mxu0 0.0
    %v534 = vand.u32 %v53, 4294901760
    %v535 = vsub.f32 %v53, %v534
    %536 = vmatmul.mubr.f32.gmra.mxu0 %v535
    %v537 = vpop.f32.mrf.mxu0
    %v538 = vadd.f32 %v391, %v537
    %v539 = vpop.f32.mrf.mxu0
    %540 = vmatprep.mubr.f32.mxu0 0.0
    %v541 = vand.u32 %v54, 4294901760
    %v542 = vsub.f32 %v54, %v541
    %543 = vmatmul.mubr.f32.gmra.mxu0 %v542
    %v544 = vpop.f32.mrf.mxu0
    %v545 = vadd.f32 %v397, %v544
    %v546 = vpop.f32.mrf.mxu0
    %547 = vmatprep.mubr.f32.mxu0 0.0
    %v548 = vand.u32 %v55, 4294901760
    %v549 = vsub.f32 %v55, %v548
    %550 = vmatmul.mubr.f32.gmra.mxu0 %v549
    %v551 = vpop.f32.mrf.mxu0
    %v552 = vadd.f32 %v403, %v551
    %v553 = vpop.f32.mrf.mxu0
    %554 = vmatprep.mubr.f32.mxu0 0.0
    %v555 = vand.u32 %v56, 4294901760
    %v556 = vsub.f32 %v56, %v555
    %557 = vmatmul.mubr.f32.gmra.mxu0 %v556
    %v558 = vpop.f32.mrf.mxu0
    %v559 = vadd.f32 %v409, %v558
    %v560 = vpop.f32.mrf.mxu0
    %561 = vmatprep.mubr.f32.mxu0 0.0
    %v562 = vand.u32 %v57, 4294901760
    %v563 = vsub.f32 %v57, %v562
    %564 = vmatmul.mubr.f32.gmra.mxu0 %v563
    %v565 = vpop.f32.mrf.mxu0
    %v566 = vadd.f32 %v415, %v565
    %v567 = vpop.f32.mrf.mxu0
    %568 = vmatprep.mubr.f32.mxu0 0.0
    %v569 = vand.u32 %v58, 4294901760
    %v570 = vsub.f32 %v58, %v569
    %571 = vmatmul.mubr.f32.gmra.mxu0 %v570
    %v572 = vpop.f32.mrf.mxu0
    %v573 = vadd.f32 %v421, %v572
    %v574 = vpop.f32.mrf.mxu0
    %575 = vmatprep.mubr.f32.mxu0 0.0
    %v576 = vand.u32 %v59, 4294901760
    %v577 = vsub.f32 %v59, %v576
    %578 = vmatmul.mubr.f32.gmra.mxu0 %v577
    %v579 = vpop.f32.mrf.mxu0
    %v580 = vadd.f32 %v427, %v579
    %v581 = vpop.f32.mrf.mxu0
    %582 = vdwg.mxu0
    %583 = vmatprep.subr.mxu0 0.0
    %v584 = vand.u32 %v75, 4294901760
    %585 = vmatpush1.msra.mxu0 %v584
    %586 = vmatprep.subr.mxu0 0.0
    %v587 = vand.u32 %v74, 4294901760
    %588 = vmatpush1.msra.mxu0 %v587
    %589 = vmatprep.subr.mxu0 0.0
    %v590 = vand.u32 %v73, 4294901760
    %591 = vmatpush1.msra.mxu0 %v590
    %592 = vmatprep.subr.mxu0 0.0
    %v593 = vand.u32 %v72, 4294901760
    %594 = vmatpush1.msra.mxu0 %v593
    %595 = vmatprep.subr.mxu0 0.0
    %v596 = vand.u32 %v71, 4294901760
    %597 = vmatpush1.msra.mxu0 %v596
    %598 = vmatprep.subr.mxu0 0.0
    %v599 = vand.u32 %v70, 4294901760
    %600 = vmatpush1.msra.mxu0 %v599
    %601 = vmatprep.subr.mxu0 0.0
    %v602 = vand.u32 %v69, 4294901760
    %603 = vmatpush1.msra.mxu0 %v602
    %604 = vmatprep.subr.mxu0 0.0
    %v605 = vand.u32 %v68, 4294901760
    %606 = vmatpush1.msra.mxu0 %v605
    %607 = vmatprep.subr.mxu0 0.0
    %v608 = vand.u32 %v67, 4294901760
    %609 = vmatpush1.msra.mxu0 %v608
    %610 = vmatprep.subr.mxu0 0.0
    %v611 = vand.u32 %v66, 4294901760
    %612 = vmatpush1.msra.mxu0 %v611
    %613 = vmatprep.subr.mxu0 0.0
    %v614 = vand.u32 %v65, 4294901760
    %615 = vmatpush1.msra.mxu0 %v614
    %616 = vmatprep.subr.mxu0 0.0
    %v617 = vand.u32 %v64, 4294901760
    %618 = vmatpush1.msra.mxu0 %v617
    %619 = vmatprep.subr.mxu0 0.0
    %v620 = vand.u32 %v63, 4294901760
    %621 = vmatpush1.msra.mxu0 %v620
    %622 = vmatprep.subr.mxu0 0.0
    %v623 = vand.u32 %v62, 4294901760
    %624 = vmatpush1.msra.mxu0 %v623
    %625 = vmatprep.subr.mxu0 0.0
    %v626 = vand.u32 %v61, 4294901760
    %627 = vmatpush1.msra.mxu0 %v626
    %628 = vmatprep.subr.mxu0 0.0
    %v629 = vand.u32 %v60, 4294901760
    %630 = vmatpush1.msra.mxu0 %v629
    %631 = vmatprep.subr.mxu0 0.0
    %632 = vmatpush2.msra.mxu0 0.0
    %633 = vmatprep.subr.mxu0 0.0
    %634 = vmatpush2.msra.mxu0 0.0
    %635 = vmatprep.subr.mxu0 0.0
    %636 = vmatpush2.msra.mxu0 0.0
    %637 = vmatprep.subr.mxu0 0.0
    %638 = vmatpush2.msra.mxu0 0.0
    %639 = vmatprep.subr.mxu0 0.0
    %640 = vmatpush2.msra.mxu0 0.0
    %641 = vmatprep.subr.mxu0 0.0
    %642 = vmatpush2.msra.mxu0 0.0
    %643 = vmatprep.subr.mxu0 0.0
    %644 = vmatpush2.msra.mxu0 0.0
    %645 = vmatprep.subr.mxu0 0.0
    %646 = vmatpush2.msra.mxu0 0.0
    %647 = vmatprep.subr.mxu0 0.0
    %648 = vmatpush2.msra.mxu0 0.0
    %649 = vmatprep.subr.mxu0 0.0
    %650 = vmatpush2.msra.mxu0 0.0
    %651 = vmatprep.subr.mxu0 0.0
    %652 = vmatpush2.msra.mxu0 0.0
    %653 = vmatprep.subr.mxu0 0.0
    %654 = vmatpush2.msra.mxu0 0.0
    %655 = vmatprep.subr.mxu0 0.0
    %656 = vmatpush2.msra.mxu0 0.0
    %657 = vmatprep.subr.mxu0 0.0
    %658 = vmatpush2.msra.mxu0 0.0
    %659 = vmatprep.subr.mxu0 0.0
    %660 = vmatpush2.msra.mxu0 0.0
    %661 = vmatprep.subr.mxu0 0.0
    %662 = vmatpush2.msra.mxu0 0.0
    %663 = vmatprep.mubr.f32.mxu0 0.0
    %v664 = vand.u32 %v52, 4294901760
    %v665 = vsub.f32 %v52, %v664
    %v666 = vand.u32 %v665, 4294901760
    %667 = vmatmul.mubr.f32.gmra.mxu0 %v666
    %v668 = vpop.f32.mrf.mxu0
    %v669 = vadd.f32 %v531, %v668
    %v670 = vpop.f32.mrf.mxu0
    %671 = vmatprep.mubr.f32.mxu0 0.0
    %v672 = vand.u32 %v53, 4294901760
    %v673 = vsub.f32 %v53, %v672
    %v674 = vand.u32 %v673, 4294901760
    %675 = vmatmul.mubr.f32.gmra.mxu0 %v674
    %v676 = vpop.f32.mrf.mxu0
    %v677 = vadd.f32 %v538, %v676
    %v678 = vpop.f32.mrf.mxu0
    %679 = vmatprep.mubr.f32.mxu0 0.0
    %v680 = vand.u32 %v54, 4294901760
    %v681 = vsub.f32 %v54, %v680
    %v682 = vand.u32 %v681, 4294901760
    %683 = vmatmul.mubr.f32.gmra.mxu0 %v682
    %v684 = vpop.f32.mrf.mxu0
    %v685 = vadd.f32 %v545, %v684
    %v686 = vpop.f32.mrf.mxu0
    %687 = vmatprep.mubr.f32.mxu0 0.0
    %v688 = vand.u32 %v55, 4294901760
    %v689 = vsub.f32 %v55, %v688
    %v690 = vand.u32 %v689, 4294901760
    %691 = vmatmul.mubr.f32.gmra.mxu0 %v690
    %v692 = vpop.f32.mrf.mxu0
    %v693 = vadd.f32 %v552, %v692
    %v694 = vpop.f32.mrf.mxu0
    %695 = vmatprep.mubr.f32.mxu0 0.0
    %v696 = vand.u32 %v56, 4294901760
    %v697 = vsub.f32 %v56, %v696
    %v698 = vand.u32 %v697, 4294901760
    %699 = vmatmul.mubr.f32.gmra.mxu0 %v698
    %v700 = vpop.f32.mrf.mxu0
    %v701 = vadd.f32 %v559, %v700
    %v702 = vpop.f32.mrf.mxu0
    %703 = vmatprep.mubr.f32.mxu0 0.0
    %v704 = vand.u32 %v57, 4294901760
    %v705 = vsub.f32 %v57, %v704
    %v706 = vand.u32 %v705, 4294901760
    %707 = vmatmul.mubr.f32.gmra.mxu0 %v706
    %v708 = vpop.f32.mrf.mxu0
    %v709 = vadd.f32 %v566, %v708
    %v710 = vpop.f32.mrf.mxu0
    %711 = vmatprep.mubr.f32.mxu0 0.0
    %v712 = vand.u32 %v58, 4294901760
    %v713 = vsub.f32 %v58, %v712
    %v714 = vand.u32 %v713, 4294901760
    %715 = vmatmul.mubr.f32.gmra.mxu0 %v714
    %v716 = vpop.f32.mrf.mxu0
    %v717 = vadd.f32 %v573, %v716
    %v718 = vpop.f32.mrf.mxu0
    %719 = vmatprep.mubr.f32.mxu0 0.0
    %v720 = vand.u32 %v59, 4294901760
    %v721 = vsub.f32 %v59, %v720
    %v722 = vand.u32 %v721, 4294901760
    %723 = vmatmul.mubr.f32.gmra.mxu0 %v722
    %v724 = vpop.f32.mrf.mxu0
    %v725 = vadd.f32 %v580, %v724
    %v726 = vpop.f32.mrf.mxu0
    %727 = vdwg.mxu0
    %728 = vmatprep.subr.mxu0 0.0
    %v729 = vand.u32 %v75, 4294901760
    %v730 = vsub.f32 %v75, %v729
    %v731 = vand.u32 %v730, 4294901760
    %732 = vmatpush1.msra.mxu0 %v731
    %733 = vmatprep.subr.mxu0 0.0
    %v734 = vand.u32 %v74, 4294901760
    %v735 = vsub.f32 %v74, %v734
    %v736 = vand.u32 %v735, 4294901760
    %737 = vmatpush1.msra.mxu0 %v736
    %738 = vmatprep.subr.mxu0 0.0
    %v739 = vand.u32 %v73, 4294901760
    %v740 = vsub.f32 %v73, %v739
    %v741 = vand.u32 %v740, 4294901760
    %742 = vmatpush1.msra.mxu0 %v741
    %743 = vmatprep.subr.mxu0 0.0
    %v744 = vand.u32 %v72, 4294901760
    %v745 = vsub.f32 %v72, %v744
    %v746 = vand.u32 %v745, 4294901760
    %747 = vmatpush1.msra.mxu0 %v746
    %748 = vmatprep.subr.mxu0 0.0
    %v749 = vand.u32 %v71, 4294901760
    %v750 = vsub.f32 %v71, %v749
    %v751 = vand.u32 %v750, 4294901760
    %752 = vmatpush1.msra.mxu0 %v751
    %753 = vmatprep.subr.mxu0 0.0
    %v754 = vand.u32 %v70, 4294901760
    %v755 = vsub.f32 %v70, %v754
    %v756 = vand.u32 %v755, 4294901760
    %757 = vmatpush1.msra.mxu0 %v756
    %758 = vmatprep.subr.mxu0 0.0
    %v759 = vand.u32 %v69, 4294901760
    %v760 = vsub.f32 %v69, %v759
    %v761 = vand.u32 %v760, 4294901760
    %762 = vmatpush1.msra.mxu0 %v761
    %763 = vmatprep.subr.mxu0 0.0
    %v764 = vand.u32 %v68, 4294901760
    %v765 = vsub.f32 %v68, %v764
    %v766 = vand.u32 %v765, 4294901760
    %767 = vmatpush1.msra.mxu0 %v766
    %768 = vmatprep.subr.mxu0 0.0
    %v769 = vand.u32 %v67, 4294901760
    %v770 = vsub.f32 %v67, %v769
    %v771 = vand.u32 %v770, 4294901760
    %772 = vmatpush1.msra.mxu0 %v771
    %773 = vmatprep.subr.mxu0 0.0
    %v774 = vand.u32 %v66, 4294901760
    %v775 = vsub.f32 %v66, %v774
    %v776 = vand.u32 %v775, 4294901760
    %777 = vmatpush1.msra.mxu0 %v776
    %778 = vmatprep.subr.mxu0 0.0
    %v779 = vand.u32 %v65, 4294901760
    %v780 = vsub.f32 %v65, %v779
    %v781 = vand.u32 %v780, 4294901760
    %782 = vmatpush1.msra.mxu0 %v781
    %783 = vmatprep.subr.mxu0 0.0
    %v784 = vand.u32 %v64, 4294901760
    %v785 = vsub.f32 %v64, %v784
    %v786 = vand.u32 %v785, 4294901760
    %787 = vmatpush1.msra.mxu0 %v786
    %788 = vmatprep.subr.mxu0 0.0
    %v789 = vand.u32 %v63, 4294901760
    %v790 = vsub.f32 %v63, %v789
    %v791 = vand.u32 %v790, 4294901760
    %792 = vmatpush1.msra.mxu0 %v791
    %793 = vmatprep.subr.mxu0 0.0
    %v794 = vand.u32 %v62, 4294901760
    %v795 = vsub.f32 %v62, %v794
    %v796 = vand.u32 %v795, 4294901760
    %797 = vmatpush1.msra.mxu0 %v796
    %798 = vmatprep.subr.mxu0 0.0
    %v799 = vand.u32 %v61, 4294901760
    %v800 = vsub.f32 %v61, %v799
    %v801 = vand.u32 %v800, 4294901760
    %802 = vmatpush1.msra.mxu0 %v801
    %803 = vmatprep.subr.mxu0 0.0
    %v804 = vand.u32 %v60, 4294901760
    %v805 = vsub.f32 %v60, %v804
    %v806 = vand.u32 %v805, 4294901760
    %807 = vmatpush1.msra.mxu0 %v806
    %808 = vmatprep.subr.mxu0 0.0
    %809 = vmatpush2.msra.mxu0 0.0
    %810 = vmatprep.subr.mxu0 0.0
    %811 = vmatpush2.msra.mxu0 0.0
    %812 = vmatprep.subr.mxu0 0.0
    %813 = vmatpush2.msra.mxu0 0.0
    %814 = vmatprep.subr.mxu0 0.0
    %815 = vmatpush2.msra.mxu0 0.0
    %816 = vmatprep.subr.mxu0 0.0
    %817 = vmatpush2.msra.mxu0 0.0
    %818 = vmatprep.subr.mxu0 0.0
    %819 = vmatpush2.msra.mxu0 0.0
    %820 = vmatprep.subr.mxu0 0.0
    %821 = vmatpush2.msra.mxu0 0.0
    %822 = vmatprep.subr.mxu0 0.0
    %823 = vmatpush2.msra.mxu0 0.0
    %824 = vmatprep.subr.mxu0 0.0
    %825 = vmatpush2.msra.mxu0 0.0
    %826 = vmatprep.subr.mxu0 0.0
    %827 = vmatpush2.msra.mxu0 0.0
    %828 = vmatprep.subr.mxu0 0.0
    %829 = vmatpush2.msra.mxu0 0.0
    %830 = vmatprep.subr.mxu0 0.0
    %831 = vmatpush2.msra.mxu0 0.0
    %832 = vmatprep.subr.mxu0 0.0
    %833 = vmatpush2.msra.mxu0 0.0
    %834 = vmatprep.subr.mxu0 0.0
    %835 = vmatpush2.msra.mxu0 0.0
    %836 = vmatprep.subr.mxu0 0.0
    %837 = vmatpush2.msra.mxu0 0.0
    %838 = vmatprep.subr.mxu0 0.0
    %839 = vmatpush2.msra.mxu0 0.0
    %840 = vmatprep.mubr.f32.mxu0 0.0
    %v841 = vand.u32 %v52, 4294901760
    %842 = vmatmul.mubr.f32.gmra.mxu0 %v841
    %v843 = vpop.f32.mrf.mxu0
    %v844 = vadd.f32 %v669, %v843
    %v845 = vpop.f32.mrf.mxu0
    %846 = vmatprep.mubr.f32.mxu0 0.0
    %v847 = vand.u32 %v53, 4294901760
    %848 = vmatmul.mubr.f32.gmra.mxu0 %v847
    %v849 = vpop.f32.mrf.mxu0
    %v850 = vadd.f32 %v677, %v849
    %v851 = vpop.f32.mrf.mxu0
    %852 = vmatprep.mubr.f32.mxu0 0.0
    %v853 = vand.u32 %v54, 4294901760
    %854 = vmatmul.mubr.f32.gmra.mxu0 %v853
    %v855 = vpop.f32.mrf.mxu0
    %v856 = vadd.f32 %v685, %v855
    %v857 = vpop.f32.mrf.mxu0
    %858 = vmatprep.mubr.f32.mxu0 0.0
    %v859 = vand.u32 %v55, 4294901760
    %860 = vmatmul.mubr.f32.gmra.mxu0 %v859
    %v861 = vpop.f32.mrf.mxu0
    %v862 = vadd.f32 %v693, %v861
    %v863 = vpop.f32.mrf.mxu0
    %864 = vmatprep.mubr.f32.mxu0 0.0
    %v865 = vand.u32 %v56, 4294901760
    %866 = vmatmul.mubr.f32.gmra.mxu0 %v865
    %v867 = vpop.f32.mrf.mxu0
    %v868 = vadd.f32 %v701, %v867
    %v869 = vpop.f32.mrf.mxu0
    %870 = vmatprep.mubr.f32.mxu0 0.0
    %v871 = vand.u32 %v57, 4294901760
    %872 = vmatmul.mubr.f32.gmra.mxu0 %v871
    %v873 = vpop.f32.mrf.mxu0
    %v874 = vadd.f32 %v709, %v873
    %v875 = vpop.f32.mrf.mxu0
    %876 = vmatprep.mubr.f32.mxu0 0.0
    %v877 = vand.u32 %v58, 4294901760
    %878 = vmatmul.mubr.f32.gmra.mxu0 %v877
    %v879 = vpop.f32.mrf.mxu0
    %v880 = vadd.f32 %v717, %v879
    %v881 = vpop.f32.mrf.mxu0
    %882 = vmatprep.mubr.f32.mxu0 0.0
    %v883 = vand.u32 %v59, 4294901760
    %884 = vmatmul.mubr.f32.gmra.mxu0 %v883
    %v885 = vpop.f32.mrf.mxu0
    %v886 = vadd.f32 %v725, %v885
    %v887 = vpop.f32.mrf.mxu0
    %888 = vdwg.mxu0
    %889 = vmatprep.subr.mxu0 0.0
    %v890 = vand.u32 %v75, 4294901760
    %891 = vmatpush1.msra.mxu0 %v890
    %892 = vmatprep.subr.mxu0 0.0
    %v893 = vand.u32 %v74, 4294901760
    %894 = vmatpush1.msra.mxu0 %v893
    %895 = vmatprep.subr.mxu0 0.0
    %v896 = vand.u32 %v73, 4294901760
    %897 = vmatpush1.msra.mxu0 %v896
    %898 = vmatprep.subr.mxu0 0.0
    %v899 = vand.u32 %v72, 4294901760
    %900 = vmatpush1.msra.mxu0 %v899
    %901 = vmatprep.subr.mxu0 0.0
    %v902 = vand.u32 %v71, 4294901760
    %903 = vmatpush1.msra.mxu0 %v902
    %904 = vmatprep.subr.mxu0 0.0
    %v905 = vand.u32 %v70, 4294901760
    %906 = vmatpush1.msra.mxu0 %v905
    %907 = vmatprep.subr.mxu0 0.0
    %v908 = vand.u32 %v69, 4294901760
    %909 = vmatpush1.msra.mxu0 %v908
    %910 = vmatprep.subr.mxu0 0.0
    %v911 = vand.u32 %v68, 4294901760
    %912 = vmatpush1.msra.mxu0 %v911
    %913 = vmatprep.subr.mxu0 0.0
    %v914 = vand.u32 %v67, 4294901760
    %915 = vmatpush1.msra.mxu0 %v914
    %916 = vmatprep.subr.mxu0 0.0
    %v917 = vand.u32 %v66, 4294901760
    %918 = vmatpush1.msra.mxu0 %v917
    %919 = vmatprep.subr.mxu0 0.0
    %v920 = vand.u32 %v65, 4294901760
    %921 = vmatpush1.msra.mxu0 %v920
    %922 = vmatprep.subr.mxu0 0.0
    %v923 = vand.u32 %v64, 4294901760
    %924 = vmatpush1.msra.mxu0 %v923
    %925 = vmatprep.subr.mxu0 0.0
    %v926 = vand.u32 %v63, 4294901760
    %927 = vmatpush1.msra.mxu0 %v926
    %928 = vmatprep.subr.mxu0 0.0
    %v929 = vand.u32 %v62, 4294901760
    %930 = vmatpush1.msra.mxu0 %v929
    %931 = vmatprep.subr.mxu0 0.0
    %v932 = vand.u32 %v61, 4294901760
    %933 = vmatpush1.msra.mxu0 %v932
    %934 = vmatprep.subr.mxu0 0.0
    %v935 = vand.u32 %v60, 4294901760
    %936 = vmatpush1.msra.mxu0 %v935
    %937 = vmatprep.subr.mxu0 0.0
    %938 = vmatpush2.msra.mxu0 0.0
    %939 = vmatprep.subr.mxu0 0.0
    %940 = vmatpush2.msra.mxu0 0.0
    %941 = vmatprep.subr.mxu0 0.0
    %942 = vmatpush2.msra.mxu0 0.0
    %943 = vmatprep.subr.mxu0 0.0
    %944 = vmatpush2.msra.mxu0 0.0
    %945 = vmatprep.subr.mxu0 0.0
    %946 = vmatpush2.msra.mxu0 0.0
    %947 = vmatprep.subr.mxu0 0.0
    %948 = vmatpush2.msra.mxu0 0.0
    %949 = vmatprep.subr.mxu0 0.0
    %950 = vmatpush2.msra.mxu0 0.0
    %951 = vmatprep.subr.mxu0 0.0
    %952 = vmatpush2.msra.mxu0 0.0
    %953 = vmatprep.subr.mxu0 0.0
    %954 = vmatpush2.msra.mxu0 0.0
    %955 = vmatprep.subr.mxu0 0.0
    %956 = vmatpush2.msra.mxu0 0.0
    %957 = vmatprep.subr.mxu0 0.0
    %958 = vmatpush2.msra.mxu0 0.0
    %959 = vmatprep.subr.mxu0 0.0
    %960 = vmatpush2.msra.mxu0 0.0
    %961 = vmatprep.subr.mxu0 0.0
    %962 = vmatpush2.msra.mxu0 0.0
    %963 = vmatprep.subr.mxu0 0.0
    %964 = vmatpush2.msra.mxu0 0.0
    %965 = vmatprep.subr.mxu0 0.0
    %966 = vmatpush2.msra.mxu0 0.0
    %967 = vmatprep.subr.mxu0 0.0
    %968 = vmatpush2.msra.mxu0 0.0
    %969 = vmatprep.mubr.f32.mxu0 0.0
    %v970 = vand.u32 %v52, 4294901760
    %971 = vmatmul.mubr.f32.gmra.mxu0 %v970
    %v972 = vpop.f32.mrf.mxu0
    %v973 = vadd.f32 %v844, %v972
    %v974 = vpop.f32.mrf.mxu0
    %975 = vmatprep.mubr.f32.mxu0 0.0
    %v976 = vand.u32 %v53, 4294901760
    %977 = vmatmul.mubr.f32.gmra.mxu0 %v976
    %v978 = vpop.f32.mrf.mxu0
    %v979 = vadd.f32 %v850, %v978
    %v980 = vpop.f32.mrf.mxu0
    %981 = vmatprep.mubr.f32.mxu0 0.0
    %v982 = vand.u32 %v54, 4294901760
    %983 = vmatmul.mubr.f32.gmra.mxu0 %v982
    %v984 = vpop.f32.mrf.mxu0
    %v985 = vadd.f32 %v856, %v984
    %v986 = vpop.f32.mrf.mxu0
    %987 = vmatprep.mubr.f32.mxu0 0.0
    %v988 = vand.u32 %v55, 4294901760
    %989 = vmatmul.mubr.f32.gmra.mxu0 %v988
    %v990 = vpop.f32.mrf.mxu0
    %v991 = vadd.f32 %v862, %v990
    %v992 = vpop.f32.mrf.mxu0
    %993 = vmatprep.mubr.f32.mxu0 0.0
    %v994 = vand.u32 %v56, 4294901760
    %995 = vmatmul.mubr.f32.gmra.mxu0 %v994
    %v996 = vpop.f32.mrf.mxu0
    %v997 = vadd.f32 %v868, %v996
    %v998 = vpop.f32.mrf.mxu0
    %999 = vmatprep.mubr.f32.mxu0 0.0
    %v1000 = vand.u32 %v57, 4294901760
    %1001 = vmatmul.mubr.f32.gmra.mxu0 %v1000
    %v1002 = vpop.f32.mrf.mxu0
    %v1003 = vadd.f32 %v874, %v1002
    %v1004 = vpop.f32.mrf.mxu0
    %1005 = vmatprep.mubr.f32.mxu0 0.0
    %v1006 = vand.u32 %v58, 4294901760
    %1007 = vmatmul.mubr.f32.gmra.mxu0 %v1006
    %v1008 = vpop.f32.mrf.mxu0
    %v1009 = vadd.f32 %v880, %v1008
    %v1010 = vpop.f32.mrf.mxu0
    %1011 = vmatprep.mubr.f32.mxu0 0.0
    %v1012 = vand.u32 %v59, 4294901760
    %1013 = vmatmul.mubr.f32.gmra.mxu0 %v1012
    %v1014 = vpop.f32.mrf.mxu0
    %v1015 = vadd.f32 %v886, %v1014
    %v1016 = vpop.f32.mrf.mxu0
    %1017 = vdwg.mxu0
    %v1018 = vadd.f32 %v44, %v973
    %v1019 = vadd.f32 %v45, %v979
    %v1020 = vadd.f32 %v46, %v985
    %v1021 = vadd.f32 %v47, %v991
    %v1022 = vadd.f32 %v48, %v997
    %v1023 = vadd.f32 %v49, %v1003
    %v1024 = vadd.f32 %v50, %v1009
    %v1025 = vadd.f32 %v51, %v1015
    %1026 = vst [vmem:[#allocation2] sm:$0xff] %v1018
    %1027 = vst [vmem:[#allocation2 + $0x8] sm:$0xff] %v1019
    %1028 = vst [vmem:[#allocation2 + $0x10] sm:$0xff] %v1020
    %1029 = vst [vmem:[#allocation2 + $0x18] sm:$0xff] %v1021
    %1030 = vst [vmem:[#allocation2 + $0x20] sm:$0xff] %v1022
    %1031 = vst [vmem:[#allocation2 + $0x28] sm:$0xff] %v1023
    %1032 = vst [vmem:[#allocation2 + $0x30] sm:$0xff] %v1024
    %1033 = vst [vmem:[#allocation2 + $0x38] sm:$0xff] %v1025
    // Predicated region
    $region26: #{tpu_custom_call.1} parent=1 // pred_check
      %p1034 = pneg %p32
    $region27: #{tpu_custom_call.1} parent=1 // pred_check_branch
      %1036 = sbr.rel (%p1034) target = $region29
    $region28: #{tpu_custom_call.1} parent=1 // pred_region
      %v1037 = vld [vmem:[#allocation2] sm:$0xff]
      %v1038 = vld [vmem:[#allocation2 + $0x8] sm:$0xff]
      %v1039 = vld [vmem:[#allocation2 + $0x10] sm:$0xff]
      %v1040 = vld [vmem:[#allocation2 + $0x18] sm:$0xff]
      %v1041 = vld [vmem:[#allocation2 + $0x20] sm:$0xff]
      %v1042 = vld [vmem:[#allocation2 + $0x28] sm:$0xff]
      %v1043 = vld [vmem:[#allocation2 + $0x30] sm:$0xff]
      %v1044 = vld [vmem:[#allocation2 + $0x38] sm:$0xff]
      %v1045 = vld [vmem:[%s2] sm:$0xff]
      %v1046 = vld [vmem:[%s2 + $0x8] sm:$0xff]
      %v1047 = vld [vmem:[%s2 + $0x10] sm:$0xff]
      %v1048 = vld [vmem:[%s2 + $0x18] sm:$0xff]
      %v1049 = vld [vmem:[%s2 + $0x20] sm:$0xff]
      %v1050 = vld [vmem:[%s2 + $0x28] sm:$0xff]
      %v1051 = vld [vmem:[%s2 + $0x30] sm:$0xff]
      %v1052 = vld [vmem:[%s2 + $0x38] sm:$0xff]
      %1054 = vset.pattern.permute.xlu0 0
      %1055 = vperm.xlu0 %1054, %v1045
      %v1056 = vpop.permute.xlu0 %1055
      %1059 = vset.pattern.permute.xlu0 0
      %1060 = vperm.xlu0 %1059, %v1046
      %v1061 = vpop.permute.xlu0 %1060
      %1064 = vset.pattern.permute.xlu0 0
      %1065 = vperm.xlu0 %1064, %v1047
      %v1066 = vpop.permute.xlu0 %1065
      %1069 = vset.pattern.permute.xlu0 0
      %1070 = vperm.xlu0 %1069, %v1048
      %v1071 = vpop.permute.xlu0 %1070
      %1074 = vset.pattern.permute.xlu0 0
      %1075 = vperm.xlu0 %1074, %v1049
      %v1076 = vpop.permute.xlu0 %1075
      %1079 = vset.pattern.permute.xlu0 0
      %1080 = vperm.xlu0 %1079, %v1050
      %v1081 = vpop.permute.xlu0 %1080
      %1084 = vset.pattern.permute.xlu0 0
      %1085 = vperm.xlu0 %1084, %v1051
      %v1086 = vpop.permute.xlu0 %1085
      %1089 = vset.pattern.permute.xlu0 0
      %1090 = vperm.xlu0 %1089, %v1052
      %v1091 = vpop.permute.xlu0 %1090
      %v1093 = vmul.f32 %v1037, %v1056
      %v1094 = vmul.f32 %v1038, %v1061
      %v1095 = vmul.f32 %v1039, %v1066
      %v1096 = vmul.f32 %v1040, %v1071
      %v1097 = vmul.f32 %v1041, %v1076
      %v1098 = vmul.f32 %v1042, %v1081
      %v1099 = vmul.f32 %v1043, %v1086
      %v1100 = vmul.f32 %v1044, %v1091
      %v1101 = vld [vmem:[%s3] sm:$0x1]
      %v1103 = vlaneseq
      %v1104 = vshrl.u32 %v1103, 7
      %v1105 = vsub.s32 0, %v1104
      %v1106 = vrot.slane %v1101, %v1105
      %v1108 = vadd.f32 %v1093, %v1106
      %v1109 = vadd.f32 %v1094, %v1106
      %v1110 = vadd.f32 %v1095, %v1106
      %v1111 = vadd.f32 %v1096, %v1106
      %v1112 = vadd.f32 %v1097, %v1106
      %v1113 = vadd.f32 %v1098, %v1106
      %v1114 = vadd.f32 %v1099, %v1106
      %v1115 = vadd.f32 %v1100, %v1106
      %1116 = vst [vmem:[#allocation6] sm:$0xff] %v1108
      %1117 = vst [vmem:[#allocation6 + $0x8] sm:$0xff] %v1109
      %1118 = vst [vmem:[#allocation6 + $0x10] sm:$0xff] %v1110
      %1119 = vst [vmem:[#allocation6 + $0x18] sm:$0xff] %v1111
      %1120 = vst [vmem:[#allocation6 + $0x20] sm:$0xff] %v1112
      %1121 = vst [vmem:[#allocation6 + $0x28] sm:$0xff] %v1113
      %1122 = vst [vmem:[#allocation6 + $0x30] sm:$0xff] %v1114
      %1123 = vst [vmem:[#allocation6 + $0x38] sm:$0xff] %v1115
    $region29: #{tpu_custom_call.1} parent=1 // pred_fallthru
      _
    // Predicated region
    $region30: #{tpu_custom_call.1} parent=1 // pred_check
      _
    $region31: #{tpu_custom_call.1} parent=1 // pred_check_branch
      %1125 = sbr.rel (0) target = $region33
    $region32: #{tpu_custom_call.1} parent=1 // pred_region
      %s1127 = ssub.s32 1024, 1024
      %1128 = vsyncadd [#allocation5], %s1127
      %s1129 = sshll.u32 [#allocation6], 4
      %s1130 = int_to_ptr.vmem [resolvable:$true] %s1129
      %1135 = dma.vmem_to_hbm [thread:$0]  %s1130, 1024, %s4, [#allocation5], 128, 128, 8
    $region33: #{tpu_custom_call.1} parent=1 // pred_fallthru
      _
    // Predicated region
    $region34: #{tpu_custom_call.1} parent=1 // pred_check
      _
    $region35: #{tpu_custom_call.1} parent=1 // pred_check_branch
      %1137 = sbr.rel (0) target = $region37
    $region36: #{tpu_custom_call.1} parent=1 // pred_region
      %1138 = dma.done [#allocation5], 1024
    $region37: #{tpu_custom_call.1} parent=1 // pred_fallthru
      _
    %1139 = vsyncpa [#allocation4], 1
    %1140 = vsyncpa [#allocation5], 1

</llo_original>
